<compile_context>
chip_gen: v5e
topology: v5e:2x2
jax: 0.10.0
libtpu: 0.0.40
codegen_flags: <defaults>
</compile_context>

<pallas_src>
import jax
import jax.numpy as jnp
from jax.experimental import pallas as pl
from jax.experimental.pallas import tpu as pltpu

EPS = 1e-9  # module default: Dice(input_dim, eps=1e-09)


def dice_kernel(x_ref, alpha_ref, o_ref):
    # One (B, TILE_D) feature-tile is resident; the batch reduction is fully local to it.
    x = x_ref[...]                                   # (B, T) native dtype
    xf = x.astype(jnp.float32)                       # no-op for f32 inputs; f32 BN stats for bf16
    alpha = alpha_ref[...]                           # (1, T) f32

    # BatchNorm1d (training mode, affine=False): batch mean + biased batch variance.
    mean = jnp.mean(xf, axis=0, keepdims=True)                       # (1, T)   XLU reduce
    centered = xf - mean                                             # (B, T)
    var = jnp.mean(centered * centered, axis=0, keepdims=True)       # (1, T)   biased
    x_hat = centered * jax.lax.rsqrt(var + EPS)                      # (B, T)   EUP rsqrt

    p = jax.nn.sigmoid(x_hat)                                        # EUP slot
    # out = p*x + alpha*(1-p)*x  ==  x * (alpha + (1 - alpha) * p)
    gate = alpha + (1.0 - alpha) * p                                 # (B, T)
    o_ref[...] = (xf * gate).astype(o_ref.dtype)


def dice(x, alpha, *, max_tile_d=512, vmem_budget_bytes=24 * 2**20):
    """x: (B, D) array; alpha: (D,) learnable parameter (promoted to f32 inside the kernel)."""
    assert max_tile_d % 128 == 0
    B, D = x.shape
    lane = 128

    # Lane-dense tile along the feature axis; take the whole (128-padded) D if it fits.
    dp128 = ((D + lane - 1) // lane) * lane
    tile_d = min(max_tile_d, dp128)
    # Shrink the tile if the double-buffered f32 working set would exceed the VMEM budget
    # (2 in-bufs + 2 out-bufs + in-kernel temporaries ~ 6 block-sized f32 buffers).
    while tile_d > lane and 6 * B * tile_d * 4 > vmem_budget_bytes:
        tile_d //= 2

    # Pad D up to a multiple of tile_d (zero columns are harmless and sliced off below).
    dpad = ((D + tile_d - 1) // tile_d) * tile_d
    if dpad != D:
        x_p = jnp.pad(x, ((0, 0), (0, dpad - D)))
        a_p = jnp.pad(alpha, (0, dpad - D))
    else:
        x_p, a_p = x, alpha
    alpha2d = a_p.reshape(1, dpad).astype(jnp.float32)

    grid = (dpad // tile_d,)
    block_bytes = B * tile_d * 4
    vmem_limit = int(min(100 * 2**20, max(16 * 2**20, 8 * block_bytes)))

    out = pl.pallas_call(
        dice_kernel,
        out_shape=jax.ShapeDtypeStruct((B, dpad), x.dtype),
        grid=grid,
        in_specs=[
            pl.BlockSpec((B, tile_d), lambda j: (0, j)),
            pl.BlockSpec((1, tile_d), lambda j: (0, j)),
        ],
        out_specs=pl.BlockSpec((B, tile_d), lambda j: (0, j)),
        compiler_params=pltpu.CompilerParams(
            dimension_semantics=("parallel",),
            vmem_limit_bytes=vmem_limit,
        ),
    )(x_p, alpha2d)

    return out[:, :D] if dpad != D else out


def dice_ref(x, alpha):
    # Pure-JAX reference mirroring the PyTorch forward (training-mode BN, eps=1e-9).
    x32 = x.astype(jnp.float32)
    mean = jnp.mean(x32, axis=0, keepdims=True)
    var = jnp.mean((x32 - mean) ** 2, axis=0, keepdims=True)
    x_hat = (x32 - mean) / jnp.sqrt(var + EPS)
    p = jax.nn.sigmoid(x_hat)
    out = p * x32 + alpha[None, :].astype(jnp.float32) * (1.0 - p) * x32
    return out.astype(x.dtype)


if __name__ == "__main__":
    key = jax.random.PRNGKey(0)

    # Primary demo shape consistent with the module: batch=8, input_dim (hidden)=32.
    B, D = 8, 32
    x = jax.random.normal(key, (B, D), dtype=jnp.float32)
    alpha = jnp.zeros((D,), dtype=jnp.float32)   # module init: alpha = zeros(input_dim)

    out = dice(x, alpha)
    jax.block_until_ready(out)
    ref = dice_ref(x, alpha)
    assert out.shape == (B, D) and out.dtype == x.dtype
    assert jnp.allclose(out, ref, atol=1e-5, rtol=1e-5), "mismatch vs reference (D=32)"

    # Exercise nonzero alpha (the alpha*(1-p)*x path).
    alpha_nz = jnp.linspace(-0.5, 0.5, D, dtype=jnp.float32)
    out2 = dice(x, alpha_nz)
    jax.block_until_ready(out2)
    assert jnp.allclose(out2, dice_ref(x, alpha_nz), atol=1e-5, rtol=1e-5)

    # Exercise the tiled + padded path (grid > 1): D not a multiple of the tile.
    k2 = jax.random.PRNGKey(1)
    B2, D2 = 16, 384
    x2 = jax.random.normal(k2, (B2, D2), dtype=jnp.float32)
    alpha2 = jax.random.normal(jax.random.PRNGKey(2), (D2,), dtype=jnp.float32) * 0.1
    out3 = dice(x2, alpha2, max_tile_d=128)      # grid = (3,), feature-tiled
    jax.block_until_ready(out3)
    assert jnp.allclose(out3, dice_ref(x2, alpha2), atol=1e-5, rtol=1e-5), "mismatch (tiled)"

    # Exercise bf16 inputs (stats accumulate in f32 inside the kernel).
    x_bf = x2.astype(jnp.bfloat16)
    out4 = dice(x_bf, alpha2)
    jax.block_until_ready(out4)
    assert out4.dtype == jnp.bfloat16
    assert jnp.allclose(out4.astype(jnp.float32),
                        dice_ref(x_bf, alpha2).astype(jnp.float32),
                        atol=3e-2, rtol=3e-2), "mismatch (bf16)"

    print("KERNEL_OK")
</pallas_src>

<mosaic_0001>
module attributes {stable_mosaic.version = 11 : i64} {
  func.func @dice_kernel(%arg0: i32, %arg1: memref<8x128xf32, #tpu.memory_space<vmem>>, %arg2: memref<1x128xf32, #tpu.memory_space<vmem>>, %arg3: memref<8x128xf32, #tpu.memory_space<vmem>>) attributes {dimension_semantics = [#tpu.dimension_semantics<parallel>], iteration_bounds = array<i64: 1>, scalar_prefetch = 0 : i64, scratch_operands = 0 : i64, tpu.core_type = #tpu.core_type<tc>, window_params = [{transform_indices = @transform_0, window_bounds = array<i64: 8, 128>}, {transform_indices = @transform_1, window_bounds = array<i64: 1, 128>}, {transform_indices = @transform_2, window_bounds = array<i64: 8, 128>}]} {
    %c0 = arith.constant 0 : index
    %c0_0 = arith.constant 0 : index
    %0 = vector.load %arg1[%c0, %c0_0] : memref<8x128xf32, #tpu.memory_space<vmem>>, vector<8x128xf32>
    %c0_1 = arith.constant 0 : index
    %c0_2 = arith.constant 0 : index
    %1 = vector.load %arg2[%c0_1, %c0_2] : memref<1x128xf32, #tpu.memory_space<vmem>>, vector<1x128xf32>
    %cst = arith.constant dense<0.000000e+00> : vector<128xf32>
    %2 = vector.multi_reduction <add>, %0, %cst [0] : vector<8x128xf32> to vector<128xf32>
    %3 = vector.shape_cast %2 : vector<128xf32> to vector<1x128xf32>
    %cst_3 = arith.constant 8.000000e+00 : f32
    %4 = vector.broadcast %cst_3 : f32 to vector<1x128xf32>
    %5 = arith.divf %3, %4 : vector<1x128xf32>
    %6 = vector.broadcast %5 : vector<1x128xf32> to vector<8x128xf32>
    %7 = arith.subf %0, %6 : vector<8x128xf32>
    %8 = arith.mulf %7, %7 : vector<8x128xf32>
    %cst_4 = arith.constant dense<0.000000e+00> : vector<128xf32>
    %9 = vector.multi_reduction <add>, %8, %cst_4 [0] : vector<8x128xf32> to vector<128xf32>
    %10 = vector.shape_cast %9 : vector<128xf32> to vector<1x128xf32>
    %cst_5 = arith.constant 8.000000e+00 : f32
    %11 = vector.broadcast %cst_5 : f32 to vector<1x128xf32>
    %12 = arith.divf %10, %11 : vector<1x128xf32>
    %cst_6 = arith.constant 9.99999971E-10 : f32
    %13 = vector.broadcast %cst_6 : f32 to vector<1x128xf32>
    %14 = arith.addf %12, %13 : vector<1x128xf32>
    %15 = math.rsqrt %14 : vector<1x128xf32>
    %16 = vector.broadcast %15 : vector<1x128xf32> to vector<8x128xf32>
    %17 = arith.mulf %7, %16 : vector<8x128xf32>
    %18 = arith.negf %17 : vector<8x128xf32>
    %19 = math.exp %18 : vector<8x128xf32>
    %cst_7 = arith.constant 1.000000e+00 : f32
    %20 = vector.broadcast %cst_7 : f32 to vector<8x128xf32>
    %21 = arith.addf %20, %19 : vector<8x128xf32>
    %22 = arith.divf %20, %21 : vector<8x128xf32>
    %cst_8 = arith.constant 1.000000e+00 : f32
    %23 = vector.broadcast %cst_8 : f32 to vector<1x128xf32>
    %24 = arith.subf %23, %1 : vector<1x128xf32>
    %25 = vector.broadcast %24 : vector<1x128xf32> to vector<8x128xf32>
    %26 = arith.mulf %25, %22 : vector<8x128xf32>
    %27 = vector.broadcast %1 : vector<1x128xf32> to vector<8x128xf32>
    %28 = arith.addf %27, %26 : vector<8x128xf32>
    %29 = arith.mulf %0, %28 : vector<8x128xf32>
    %c0_9 = arith.constant 0 : index
    %c0_10 = arith.constant 0 : index
    %30 = vector.load %arg3[%c0_9, %c0_10] : memref<8x128xf32, #tpu.memory_space<vmem>>, vector<8x128xf32>
    tpu.vector_store %arg3[%c0_9, %c0_10], %29 {strides = array<i32>} : memref<8x128xf32, #tpu.memory_space<vmem>>, vector<8x128xf32>,
    return
  }
  func.func @transform_0(%arg0: i32) -> (i32, i32) {
    %c0_i32 = arith.constant 0 : i32
    %c0_i32_0 = arith.constant 0 : i32
    return %c0_i32, %arg0 : i32, i32
  }
  func.func @transform_1(%arg0: i32) -> (i32, i32) {
    %c0_i32 = arith.constant 0 : i32
    %c0_i32_0 = arith.constant 0 : i32
    return %c0_i32, %arg0 : i32, i32
  }
  func.func @transform_2(%arg0: i32) -> (i32, i32) {
    %c0_i32 = arith.constant 0 : i32
    %c0_i32_0 = arith.constant 0 : i32
    return %c0_i32, %arg0 : i32, i32
  }
}

</mosaic_0001>

<llo_original>
// kernel: tpu_custom_call.1
$region0: #{tpu_custom_call.1}
  #allocation0 [shape = 'u32[]', space=smem, size = 0x4, offset = 0x4, fixed_abs, tag = 'smem constant byte address 0x4 - core index']
  #allocation1 [shape = 'u32[72,128]{1,0:T(1,128)}', space=vmem, size = 0x9000, scoped, tag = 'internal scratch']
  %s0 = inlined_call_operand.hbm [shape: f32[8,128], index: 0, kind: input, shape index: {}]
  %s1 = inlined_call_operand.hbm [shape: f32[1,128], index: 1, kind: input, shape index: {}]
  %s2 = inlined_call_operand.hbm [shape: f32[8,128], index: 2, kind: output, shape index: {}]
  %s3 = sld [smem:[#allocation0]]
  $region26: #{tpu_custom_call.1} parent=0
    _
  %s5 = ssub.s32 1, %s3
  %s6 = scalar_select 0, %s5, %s3
  $region1: #{tpu_custom_call.1} parent=0
    #allocation2 [shape = 'u8[4096]{0}', space=vmem, size = 0x1000, scoped, tag = 'input window, operand 0, single buffered']
    #allocation3 [shape = 's32[1]{0}', space=sflag, size = 0x4, scoped, tag = 'scoped memory for tpu_custom_call.1']
    #allocation4 [shape = 's32[1]{0}', space=sflag, size = 0x4, scoped, tag = 'scoped memory for tpu_custom_call.1']
    #allocation5 [shape = 'u8[512]{0}', space=vmem, size = 0x400, scoped, tag = 'input window, operand 1, single buffered']
    #allocation6 [shape = 's32[1]{0}', space=sflag, size = 0x4, scoped, tag = 'scoped memory for tpu_custom_call.1']
    #allocation7 [shape = 'u8[4096]{0}', space=vmem, size = 0x1000, scoped, tag = 'output window, operand 0, single buffered']
    %7 = vsyncpa [#allocation3], 0
    %8 = vsyncpa [#allocation6], 0
    %9 = vsyncpa [#allocation4], 0
    // Predicated region
    $region2: #{tpu_custom_call.1} parent=1 // pred_check
      _
    $region3: #{tpu_custom_call.1} parent=1 // pred_check_branch
      %11 = sbr.rel (0) target = $region5
    $region4: #{tpu_custom_call.1} parent=1 // pred_region
      %13 = vsyncadd [#allocation3], 0
      %s15 = sshll.u32 %s0, 4
      %s16 = int_to_ptr.hbm [resolvable:$true] %s15
      %s17 = sshll.u32 [#allocation2], 4
      %s18 = int_to_ptr.vmem [resolvable:$true] %s17
      %20 = dma.hbm_to_vmem [thread:$0]  %s16, 128, %s18, [#allocation3]
    $region5: #{tpu_custom_call.1} parent=1 // pred_fallthru
      _
    // Predicated region
    $region6: #{tpu_custom_call.1} parent=1 // pred_check
      _
    $region7: #{tpu_custom_call.1} parent=1 // pred_check_branch
      %22 = sbr.rel (0) target = $region9
    $region8: #{tpu_custom_call.1} parent=1 // pred_region
      %24 = vsyncadd [#allocation6], 0
      %s26 = sshll.u32 %s1, 4
      %s27 = int_to_ptr.hbm [resolvable:$true] %s26
      %s28 = sshll.u32 [#allocation5], 4
      %s29 = int_to_ptr.vmem [resolvable:$true] %s28
      %31 = dma.hbm_to_vmem [thread:$0]  %s27, 16, %s29, [#allocation6]
    $region9: #{tpu_custom_call.1} parent=1 // pred_fallthru
      _
    // Predicated region
    $region10: #{tpu_custom_call.1} parent=1 // pred_check
      _
    $region11: #{tpu_custom_call.1} parent=1 // pred_check_branch
      %33 = sbr.rel (0) target = $region13
    $region12: #{tpu_custom_call.1} parent=1 // pred_region
      %35 = dma.done [#allocation3], 128
    $region13: #{tpu_custom_call.1} parent=1 // pred_fallthru
      _
    // Predicated region
    $region14: #{tpu_custom_call.1} parent=1 // pred_check
      _
    $region15: #{tpu_custom_call.1} parent=1 // pred_check_branch
      %37 = sbr.rel (0) target = $region17
    $region16: #{tpu_custom_call.1} parent=1 // pred_region
      %39 = dma.done [#allocation6], 16
    $region17: #{tpu_custom_call.1} parent=1 // pred_fallthru
      _
    %v40 = vld [vmem:[#allocation2] sm:$0xff]
    %v41 = vld [vmem:[#allocation5] sm:$0x1]
    %v42 = vrot.slane %v40, 4
    %v43 = vadd.f32 %v40, %v42
    %v44 = vrot.slane %v43, 2
    %v45 = vadd.f32 %v43, %v44
    %v46 = vrot.slane %v45, 1
    %v47 = vadd.f32 %v45, %v46
    %v48 = vrcp.pop 8.0
    %v49 = vmul.f32 8.0, %v48
    %v50 = vsub.f32 1.0, %v49
    %v51 = vmul.f32 %v48, %v50
    %v52 = vadd.f32 %v48, %v51
    %vm53 = vweird.f32 %v48
    %v54 = vsel %vm53, %v48, %v52
    %v55 = vmul.f32 %v47, %v54
    %v56 = vsub.f32 %v40, %v55
    %v57 = vmul.f32 %v56, %v56
    %v58 = vrot.slane %v57, 4
    %v59 = vadd.f32 %v57, %v58
    %v60 = vrot.slane %v59, 2
    %v61 = vadd.f32 %v59, %v60
    %v62 = vrot.slane %v61, 1
    %v63 = vadd.f32 %v61, %v62
    %v64 = vmul.f32 %v63, %v54
    %v65 = vadd.f32 %v64, 1e-09
    %v66 = vrsqrt.pop %v65
    %v67 = vmul.f32 %v66, %v65
    %v68 = vmul.f32 %v67, %v66
    %v69 = vmul.f32 0.5, %v68
    %v70 = vsub.f32 1.5, %v69
    %v71 = vmul.f32 %v66, %v70
    %vm72 = vweird.f32 %v65
    %vm73 = vweird.f32 %v66
    %vm74 = vmor %vm72, %vm73
    %v75 = vsel %vm74, %v66, %v71
    %v76 = vmul.f32 %v56, %v75
    %v77 = vxor.u32 %v76, 2147483648
    %v78 = vmul.f32 %v77, 1.442695
    %v79 = vpow.pop %v78
    %v80 = vadd.f32 %v79, 1.0
    %v81 = vrcp.pop %v80
    %v82 = vmul.f32 %v80, %v81
    %v83 = vsub.f32 1.0, %v82
    %v84 = vmul.f32 %v81, %v83
    %v85 = vadd.f32 %v81, %v84
    %vm86 = vweird.f32 %v80
    %vm87 = vweird.f32 %v81
    %vm88 = vmor %vm86, %vm87
    %v89 = vsel %vm88, %v81, %v85
    %v90 = vand.u32 2147483647, %v80
    %vm91 = vcmp.eq.f32.partialorder %v90, 8.507059e+37
    %v92 = vand.u32 %v80, 2147483648
    %v93 = vor.u32 1.1754944e-38, %v92
    %v94 = vsel %vm91, %v93, %v89
    %v95 = vmul.f32 1.0, %v94
    %v96 = vsub.f32 1.0, %v41
    %v98 = vperm.slane %v96, 0
    %v100 = vmul.f32 %v98, %v95
    %v102 = vperm.slane %v41, 0
    %v104 = vadd.f32 %v102, %v100
    %v105 = vmul.f32 %v40, %v104
    %106 = vst [vmem:[#allocation7] sm:$0xff] %v105
    // Predicated region
    $region18: #{tpu_custom_call.1} parent=1 // pred_check
      _
    $region19: #{tpu_custom_call.1} parent=1 // pred_check_branch
      %108 = sbr.rel (0) target = $region21
    $region20: #{tpu_custom_call.1} parent=1 // pred_region
      %110 = vsyncadd [#allocation4], 0
      %s112 = sshll.u32 [#allocation7], 4
      %s113 = int_to_ptr.vmem [resolvable:$true] %s112
      %s114 = sshll.u32 %s2, 4
      %s115 = int_to_ptr.hbm [resolvable:$true] %s114
      %117 = dma.vmem_to_hbm [thread:$0]  %s113, 128, %s115, [#allocation4]
    $region21: #{tpu_custom_call.1} parent=1 // pred_fallthru
      _
    // Predicated region
    $region22: #{tpu_custom_call.1} parent=1 // pred_check
      _
    $region23: #{tpu_custom_call.1} parent=1 // pred_check_branch
      %119 = sbr.rel (0) target = $region25
    $region24: #{tpu_custom_call.1} parent=1 // pred_region
      %121 = dma.done [#allocation4], 128
    $region25: #{tpu_custom_call.1} parent=1 // pred_fallthru
      _
    %122 = vsyncpa [#allocation3], 1
    %123 = vsyncpa [#allocation6], 1
    %124 = vsyncpa [#allocation4], 1

</llo_original>
